<compile_context>
chip_gen: v5e
topology: v5e:2x2
jax: 0.10.0
libtpu: 0.0.40
codegen_flags: <defaults>
</compile_context>

<pallas_src>
import math
import jax
import jax.numpy as jnp
from jax.experimental import pallas as pl
from jax.experimental.pallas import tpu as pltpu

SUBLANE = 8


def _round_up(x, m):
    return (x + m - 1) // m * m


def logreg_kernel(x_ref, w_ref, b_ref, o_ref):
    # x: (TILE_N, ft_in), w: (ft_in, C), b: (1, C) -> o: (TILE_N, C)
    acc = jnp.dot(x_ref[...], w_ref[...], preferred_element_type=jnp.float32)
    o_ref[...] = (acc + b_ref[...]).astype(o_ref.dtype)


def logreg_forward(seq, weight, bias, *, tile_n=8192):
    """seq: (N, ft_in); weight: (nb_classes, ft_in); bias: (nb_classes,).

    Returns (N, nb_classes), identical to torch nn.Linear: seq @ weight.T + bias.
    """
    N, ft_in = seq.shape
    nb_classes = weight.shape[0]

    # Weight transposed once in the wrapper; matmul accumulates in f32.
    w_t = weight.T.astype(seq.dtype)                      # (ft_in, nb_classes)
    b2 = bias.astype(jnp.float32).reshape(1, nb_classes)  # (1, nb_classes)

    # Row tile: big tiles amortize the ~0.35 us per-step overhead, but keep
    # >= ~4 grid steps so multi-TC chips (v7x) shard the parallel axis.
    # tile_n must be a multiple of 8 (sublane).
    tile_n = min(tile_n, _round_up(pl.cdiv(N, 4), SUBLANE))
    tile_n = max(SUBLANE, _round_up(tile_n, SUBLANE))

    grid = (pl.cdiv(N, tile_n),)   # ragged last block: OOB rows are discarded

    cost = pl.CostEstimate(
        flops=2 * N * ft_in * nb_classes,
        transcendentals=0,
        bytes_accessed=(
            N * ft_in * seq.dtype.itemsize          # seq read
            + ft_in * nb_classes * seq.dtype.itemsize  # weight read
            + nb_classes * 4                           # bias read (f32)
            + N * nb_classes * seq.dtype.itemsize      # output write
        ),
    )

    out = pl.pallas_call(
        logreg_kernel,
        out_shape=jax.ShapeDtypeStruct((N, nb_classes), seq.dtype),
        grid=grid,
        in_specs=[
            pl.BlockSpec((tile_n, ft_in), lambda i: (i, 0)),      # row-tile of seq
            pl.BlockSpec((ft_in, nb_classes), lambda i: (0, 0)),  # full weight, resident
            pl.BlockSpec((1, nb_classes), lambda i: (0, 0)),      # full bias, resident
        ],
        out_specs=pl.BlockSpec((tile_n, nb_classes), lambda i: (i, 0)),
        compiler_params=pltpu.CompilerParams(
            dimension_semantics=("parallel",),
        ),
        cost_estimate=cost,
    )(seq, w_t, b2)

    return out


def xavier_uniform(key, fan_out, fan_in, dtype=jnp.float32):
    # Matches torch.nn.init.xavier_uniform_ (gain=1.0) on a (fan_out, fan_in) weight.
    a = math.sqrt(6.0 / (fan_in + fan_out))
    return jax.random.uniform(key, (fan_out, fan_in), dtype=dtype, minval=-a, maxval=a)


if __name__ == "__main__":
    key = jax.random.PRNGKey(0)
    k_x, k_w = jax.random.split(key)

    N = 8            # number of nodes / samples
    ft_in = 32       # input feature dim
    nb_classes = 8   # number of classes

    seq = jax.random.normal(k_x, (N, ft_in), dtype=jnp.float32)

    # Parameter init matching the module's __init__:
    #   xavier_uniform_ on weight (nb_classes, ft_in), bias filled with 0.0.
    weight = xavier_uniform(k_w, nb_classes, ft_in)        # (nb_classes, ft_in)
    bias = jnp.zeros((nb_classes,), dtype=jnp.float32)

    out = logreg_forward(seq, weight, bias)
    out = jax.block_until_ready(out)

    # Sanity check against plain JAX reference of the same forward pass.
    ref = seq @ weight.T + bias
    assert out.shape == (N, nb_classes)
    assert jnp.allclose(out, ref, atol=1e-5, rtol=1e-5)

    print("KERNEL_OK")
</pallas_src>

<mosaic_0001>
module attributes {stable_mosaic.version = 11 : i64} {
  func.func @logreg_kernel(%arg0: i32, %arg1: memref<8x32xf32, #tpu.memory_space<vmem>>, %arg2: memref<32x8xf32, #tpu.memory_space<vmem>>, %arg3: memref<1x8xf32, #tpu.memory_space<vmem>>, %arg4: memref<8x8xf32, #tpu.memory_space<vmem>>) attributes {dimension_semantics = [#tpu.dimension_semantics<parallel>], iteration_bounds = array<i64: 1>, scalar_prefetch = 0 : i64, scratch_operands = 0 : i64, tpu.core_type = #tpu.core_type<tc>, window_params = [{transform_indices = @transform_0, window_bounds = array<i64: 8, 32>}, {pipeline_mode = #tpu.pipeline_mode<synchronous>, transform_indices = @transform_1, window_bounds = array<i64: 32, 8>}, {pipeline_mode = #tpu.pipeline_mode<synchronous>, transform_indices = @transform_2, window_bounds = array<i64: 1, 8>}, {transform_indices = @transform_3, window_bounds = array<i64: 8, 8>}]} {
    %c0 = arith.constant 0 : index
    %c0_0 = arith.constant 0 : index
    %0 = vector.load %arg1[%c0, %c0_0] : memref<8x32xf32, #tpu.memory_space<vmem>>, vector<8x32xf32>
    %c0_1 = arith.constant 0 : index
    %c0_2 = arith.constant 0 : index
    %1 = vector.load %arg2[%c0_1, %c0_2] : memref<32x8xf32, #tpu.memory_space<vmem>>, vector<32x8xf32>
    %cst = arith.constant dense<0.000000e+00> : vector<8x8xf32>
    %2 = tpu.matmul %0, %1, %cst {dimension_numbers = #tpu.dot_dimension_numbers<[1], [0], [0], [1], [0, 0, 1, 1], [], []>} : vector<8x32xf32>, vector<32x8xf32>, vector<8x8xf32> -> vector<8x8xf32>
    %c0_3 = arith.constant 0 : index
    %c0_4 = arith.constant 0 : index
    %3 = vector.load %arg3[%c0_3, %c0_4] : memref<1x8xf32, #tpu.memory_space<vmem>>, vector<1x8xf32>
    %4 = vector.broadcast %3 : vector<1x8xf32> to vector<8x8xf32>
    %5 = arith.addf %2, %4 : vector<8x8xf32>
    %c0_5 = arith.constant 0 : index
    %c0_6 = arith.constant 0 : index
    %6 = vector.load %arg4[%c0_5, %c0_6] : memref<8x8xf32, #tpu.memory_space<vmem>>, vector<8x8xf32>
    tpu.vector_store %arg4[%c0_5, %c0_6], %5 {strides = array<i32>} : memref<8x8xf32, #tpu.memory_space<vmem>>, vector<8x8xf32>,
    return
  }
  func.func @transform_0(%arg0: i32) -> (i32, i32) {
    %c0_i32 = arith.constant 0 : i32
    %c0_i32_0 = arith.constant 0 : i32
    return %arg0, %c0_i32 : i32, i32
  }
  func.func @transform_1(%arg0: i32) -> (i32, i32) {
    %c0_i32 = arith.constant 0 : i32
    %c0_i32_0 = arith.constant 0 : i32
    %c0_i32_1 = arith.constant 0 : i32
    return %c0_i32, %c0_i32_0 : i32, i32
  }
  func.func @transform_2(%arg0: i32) -> (i32, i32) {
    %c0_i32 = arith.constant 0 : i32
    %c0_i32_0 = arith.constant 0 : i32
    %c0_i32_1 = arith.constant 0 : i32
    return %c0_i32, %c0_i32_0 : i32, i32
  }
  func.func @transform_3(%arg0: i32) -> (i32, i32) {
    %c0_i32 = arith.constant 0 : i32
    %c0_i32_0 = arith.constant 0 : i32
    return %arg0, %c0_i32 : i32, i32
  }
}

</mosaic_0001>

<llo_original>
// kernel: tpu_custom_call.1
$region0: #{tpu_custom_call.1}
  #allocation0 [shape = 'u32[]', space=smem, size = 0x4, offset = 0x4, fixed_abs, tag = 'smem constant byte address 0x4 - core index']
  #allocation1 [shape = 'u32[72,128]{1,0:T(1,128)}', space=vmem, size = 0x9000, scoped, tag = 'internal scratch']
  %s0 = inlined_call_operand.vmem [shape: f32[8,32], index: 0, kind: input, shape index: {}]
  %s1 = inlined_call_operand.vmem [shape: f32[32,8], index: 1, kind: input, shape index: {}]
  %s2 = inlined_call_operand.vmem [shape: f32[1,8], index: 2, kind: input, shape index: {}]
  %s3 = inlined_call_operand.hbm [shape: f32[8,8], index: 3, kind: output, shape index: {}]
  %s4 = sld [smem:[#allocation0]]
  $region22: #{tpu_custom_call.1} parent=0
    _
  %s6 = ssub.s32 1, %s4
  %s7 = scalar_select 0, %s6, %s4
  $region1: #{tpu_custom_call.1} parent=0
    #allocation2 [shape = 'u8[4096]{0}', space=vmem, size = 0x1000, scoped, tag = 'output window, operand 0, single buffered']
    #allocation3 [shape = 's32[1]{0}', space=sflag, size = 0x4, scoped, tag = 'scoped memory for tpu_custom_call.1']
    %8 = vsyncpa [#allocation3], 0
    // Predicated region
    $region2: #{tpu_custom_call.1} parent=1 // pred_check
      _
    $region3: #{tpu_custom_call.1} parent=1 // pred_check_branch
      %10 = sbr.rel (0) target = $region5
    $region4: #{tpu_custom_call.1} parent=1 // pred_region
      _
    $region5: #{tpu_custom_call.1} parent=1 // pred_fallthru
      _
    // Predicated region
    $region6: #{tpu_custom_call.1} parent=1 // pred_check
      _
    $region7: #{tpu_custom_call.1} parent=1 // pred_check_branch
      %12 = sbr.rel (0) target = $region9
    $region8: #{tpu_custom_call.1} parent=1 // pred_region
      _
    $region9: #{tpu_custom_call.1} parent=1 // pred_fallthru
      _
    // Predicated region
    $region10: #{tpu_custom_call.1} parent=1 // pred_check
      _
    $region11: #{tpu_custom_call.1} parent=1 // pred_check_branch
      %14 = sbr.rel (0) target = $region13
    $region12: #{tpu_custom_call.1} parent=1 // pred_region
      _
    $region13: #{tpu_custom_call.1} parent=1 // pred_fallthru
      _
    %v15 = vld [vmem:[%s0] sm:$0xff]
    %v16 = vld [vmem:[%s1] sm:$0xff]
    %v17 = vld [vmem:[%s1 + $0x8] sm:$0xff]
    %v18 = vld [vmem:[%s1 + $0x10] sm:$0xff]
    %v19 = vld [vmem:[%s1 + $0x18] sm:$0xff]
    %v20 = vld [vmem:[%s2] sm:$0x1]
    %v22 = vperm.slane %v20, 0
    %vm24 = vcmask 261120
    %v26 = vsel %vm24, %v15, 0
    %28 = vmatpush.msra.mxu0 0.0
    %29 = vmatpush.msra.mxu0 0.0
    %30 = vmatpush.msra.mxu0 0.0
    %31 = vmatpush.msra.mxu0 0.0
    %32 = vmatpush.msra.mxu0 0.0
    %33 = vmatpush.msra.mxu0 0.0
    %34 = vmatpush.msra.mxu0 0.0
    %35 = vmatpush.msra.mxu0 0.0
    %36 = vmatpush.msra.mxu0 0.0
    %37 = vmatpush.msra.mxu0 0.0
    %38 = vmatpush.msra.mxu0 0.0
    %39 = vmatpush.msra.mxu0 0.0
    %40 = vmatpush.msra.mxu0 %v19
    %41 = vmatpush.msra.mxu0 %v18
    %42 = vmatpush.msra.mxu0 %v17
    %43 = vmatpush.msra.mxu0 %v16
    %44 = vmatmul.f32.gmra.mxu0 %v26
    %v45 = vpop.f32.mrf.mxu0
    %v46 = vadd.f32 %v22, %v45
    %47 = vdwg.mxu0
    %vm48 = vcmask 64512
    %49 = vst.msk [vmem:[#allocation2] sm:$0xff] %vm48, %v46
    // Predicated region
    $region14: #{tpu_custom_call.1} parent=1 // pred_check
      _
    $region15: #{tpu_custom_call.1} parent=1 // pred_check_branch
      %51 = sbr.rel (0) target = $region17
    $region16: #{tpu_custom_call.1} parent=1 // pred_region
      %53 = vsyncadd [#allocation3], 0
      %s55 = sshll.u32 [#allocation2], 4
      %s56 = int_to_ptr.vmem [resolvable:$true] %s55
      %s57 = sshll.u32 %s3, 4
      %s58 = int_to_ptr.hbm [resolvable:$true] %s57
      %60 = dma.vmem_to_hbm [thread:$0]  %s56, 128, %s58, [#allocation3]
    $region17: #{tpu_custom_call.1} parent=1 // pred_fallthru
      _
    // Predicated region
    $region18: #{tpu_custom_call.1} parent=1 // pred_check
      _
    $region19: #{tpu_custom_call.1} parent=1 // pred_check_branch
      %62 = sbr.rel (0) target = $region21
    $region20: #{tpu_custom_call.1} parent=1 // pred_region
      %64 = dma.done [#allocation3], 128
    $region21: #{tpu_custom_call.1} parent=1 // pred_fallthru
      _
    %65 = vsyncpa [#allocation3], 1

</llo_original>
